<compile_context>
chip_gen: v6e
topology: v6e:2x2x1
jax: 0.10.0
libtpu: 0.0.40
codegen_flags: <defaults>
</compile_context>

<pallas_src>
import jax
import jax.numpy as jnp
from jax import lax
from jax.experimental import pallas as pl
from jax.experimental.pallas import tpu as pltpu


def _make_dice_kernel(*, row_tile, cols, total, inner_tiles,
                      full_tiles, need_mask, slabs_per_iter):
    """Builds the streaming Dice partial-sum kernel for a fixed geometry."""
    rows_full = total // cols        # number of fully-valid slab rows
    rem_cols = total % cols          # valid columns in the single ragged row
    n_iters = (row_tile // 8) // slabs_per_iter

    def kernel(p_ref, t_ref, out_ref, ht_acc, h_acc, t_acc):
        c = pl.program_id(0)                 # TensorCore split index
        k = pl.program_id(1)                 # row-tile index within the split
        g = c * inner_tiles + k              # unclamped global row-tile index

        @pl.when(k == 0)
        def _init():
            ht_acc[...] = jnp.zeros_like(ht_acc)
            h_acc[...] = jnp.zeros_like(h_acc)
            t_acc[...] = jnp.zeros_like(t_acc)

        def accumulate(masked):
            row_base = g * row_tile

            def body(i, carry):
                ht_c, h_c, t_c = carry
                for s in range(slabs_per_iter):
                    r0 = pl.multiple_of(i * (8 * slabs_per_iter) + s * 8, 8)
                    p = p_ref[pl.ds(r0, 8), :].astype(jnp.float32)
                    t = t_ref[pl.ds(r0, 8), :].astype(jnp.float32)
                    h = jnp.tanh(0.5 * p)        # sigmoid(p) = 0.5*h + 0.5
                    if masked:
                        row = (lax.broadcasted_iota(jnp.int32, (8, cols), 0)
                               + (row_base + r0))
                        if rem_cols == 0:
                            valid = row < rows_full
                        else:
                            col = lax.broadcasted_iota(jnp.int32, (8, cols), 1)
                            valid = (row < rows_full) | (
                                (row == rows_full) & (col < rem_cols))
                        h = jnp.where(valid, h, 0.0)
                        t = jnp.where(valid, t, 0.0)
                    ht_c = ht_c + h * t
                    h_c = h_c + h
                    t_c = t_c + t
                return ht_c, h_c, t_c

            z = jnp.zeros((8, cols), jnp.float32)
            ht_s, h_s, t_s = lax.fori_loop(0, n_iters, body, (z, z, z))
            # One (8, COLS) RMW per grid step per accumulator.
            ht_acc[...] += ht_s
            h_acc[...] += h_s
            t_acc[...] += t_s

        if need_mask:
            @pl.when(g < full_tiles)
            def _fast():
                accumulate(False)

            @pl.when(g >= full_tiles)
            def _ragged():
                accumulate(True)
        else:
            accumulate(False)

        @pl.when(k == inner_tiles - 1)
        def _finalize():
            s_ht = jnp.sum(ht_acc[...])
            s_h = jnp.sum(h_acc[...])
            s_t = jnp.sum(t_acc[...])
            sub = lax.broadcasted_iota(jnp.int32, (8, 128), 0)
            out_ref[0] = jnp.where(
                sub == 0, s_ht,
                jnp.where(sub == 1, s_h,
                          jnp.where(sub == 2, s_t, 0.0)))

    return kernel


def dice_loss(predict, target, epsilon=1e-5):
    assert predict.shape == target.shape, (
        "the size of predict and target must be equal.")
    total = predict.size

    # ---- slab geometry: lane-dense, no full-array padding pass -------------
    cols = None
    for c in (512, 256, 128):                       # prefer rows >= 8
        if total % c == 0 and total // c >= 8:
            cols = c
            break
    if cols is None:
        for c in (512, 256, 128):
            if total % c == 0:
                cols = c
                break
    pad = 0
    if cols is None:
        # TODO(synk): totals not divisible by 128 need one minimal zero-pad
        # copy; the in-kernel mask makes the pad value irrelevant.
        cols = 128
        pad = (-total) % cols
    rows = (total + pad) // cols

    target_tile_elems = 1 << 20                     # ~4 MiB f32 per input tile
    row_tile = max(8, min(((rows + 7) // 8) * 8,
                          (target_tile_elems // cols) // 8 * 8))
    grid_rows = -(-rows // row_tile)                # cdiv
    num_splits = 2                                  # one slice per v7x TC
    inner_tiles = -(-grid_rows // num_splits)
    n_global = num_splits * inner_tiles
    tile_elems = row_tile * cols
    full_tiles = total // tile_elems                # tiles with no invalid elem
    need_mask = (n_global * tile_elems != total)

    p_flat = predict.reshape(-1)
    t_flat = target.reshape(-1)
    if pad:
        p_flat = jnp.pad(p_flat, (0, pad))
        t_flat = jnp.pad(t_flat, (0, pad))
    p2 = p_flat.reshape(rows, cols)
    t2 = t_flat.reshape(rows, cols)

    slabs = row_tile // 8
    spi = next(s for s in (8, 4, 2, 1) if slabs % s == 0)

    kernel = _make_dice_kernel(
        row_tile=row_tile, cols=cols, total=total, inner_tiles=inner_tiles,
        full_tiles=full_tiles, need_mask=need_mask, slabs_per_iter=spi)

    def row_map(c, k):
        # Clamp so the (possibly duplicated) trailing tile never DMAs OOB;
        # its contribution is fully masked to zero inside the kernel.
        return (jnp.minimum(c * inner_tiles + k, grid_rows - 1), 0)

    in_bytes = p2.size * p2.dtype.itemsize + t2.size * t2.dtype.itemsize
    cost = pl.CostEstimate(flops=7 * total, transcendentals=total,
                           bytes_accessed=in_bytes + num_splits * 8 * 128 * 4)

    parts = pl.pallas_call(
        kernel,
        out_shape=jax.ShapeDtypeStruct((num_splits, 8, 128), jnp.float32),
        grid_spec=pltpu.PrefetchScalarGridSpec(
            num_scalar_prefetch=0,
            grid=(num_splits, inner_tiles),
            in_specs=[
                pl.BlockSpec((row_tile, cols), row_map),
                pl.BlockSpec((row_tile, cols), row_map),
            ],
            out_specs=pl.BlockSpec((1, 8, 128), lambda c, k: (c, 0, 0)),
            scratch_shapes=[
                pltpu.VMEM((8, cols), jnp.float32),   # sum tanh(p/2) * t
                pltpu.VMEM((8, cols), jnp.float32),   # sum tanh(p/2)
                pltpu.VMEM((8, cols), jnp.float32),   # sum t
            ],
        ),
        compiler_params=pltpu.CompilerParams(
            dimension_semantics=("parallel", "arbitrary"),
            vmem_limit_bytes=48 * 1024 * 1024,
        ),
        cost_estimate=cost,
    )(p2, t2)

    s_ht = parts[:, 0, 0].sum()       # sum over valid elems of tanh(p/2) * t
    s_h = parts[:, 1, 0].sum()        # sum over valid elems of tanh(p/2)
    s_t = parts[:, 2, 0].sum()        # sum over valid elems of t

    total_f = jnp.float32(total)
    intersection = 0.5 * s_ht + 0.5 * s_t        # sum sigmoid(p) * t
    sum_sig = 0.5 * s_h + 0.5 * total_f          # sum sigmoid(p)
    union = sum_sig + s_t                        # sum (sigmoid(p) + t)

    score = 1.0 - 2.0 * (intersection + epsilon) / (union + epsilon)
    # PyTorch: `if target.view(num,-1).sum().item() == 0: return 0.0`
    # TODO(synk): the reference also host-prints the target sum via .item();
    # data-dependent host printing has no clean Pallas equivalent.
    return jnp.where(s_t == 0.0, jnp.float32(0.0), score)


def dice_loss_ref(predict, target, epsilon=1e-5):
    num = predict.shape[0]
    pre = jax.nn.sigmoid(predict.astype(jnp.float32)).reshape(num, -1)
    tar = target.astype(jnp.float32).reshape(num, -1)
    inter = (pre * tar).sum(-1).sum()
    union = (pre + tar).sum(-1).sum()
    score = 1.0 - 2.0 * (inter + epsilon) / (union + epsilon)
    return jnp.where(tar.sum() == 0.0, jnp.float32(0.0), score)


if __name__ == "__main__":
    key = jax.random.PRNGKey(0)
    kp, kt = jax.random.split(key)

    # NCHW inputs, consistent with a U-Net segmentation head.
    N, C, H, W = 2, 4, 16, 16
    predict = jax.random.normal(kp, (N, C, H, W), dtype=jnp.float32)
    target = (jax.random.uniform(kt, (N, C, H, W)) > 0.5).astype(jnp.float32)

    out = jax.block_until_ready(dice_loss(predict, target))
    ref = jax.block_until_ready(dice_loss_ref(predict, target))
    assert jnp.allclose(out, ref, atol=1e-5, rtol=1e-5), (out, ref)

    # Zero-target branch: reference returns exactly 0.0.
    out_zero = jax.block_until_ready(dice_loss(predict, jnp.zeros_like(target)))
    assert out_zero == 0.0, out_zero

    print("KERNEL_OK")
</pallas_src>

<mosaic_0001>
module attributes {stable_mosaic.version = 11 : i64} {
  func.func @kernel(%arg0: i32, %arg1: i32, %arg2: memref<8x256xf32, #tpu.memory_space<vmem>>, %arg3: memref<8x256xf32, #tpu.memory_space<vmem>>, %arg4: memref<1x8x128xf32, #tpu.memory_space<vmem>>, %arg5: memref<8x256xf32, #tpu.memory_space<vmem>>, %arg6: memref<8x256xf32, #tpu.memory_space<vmem>>, %arg7: memref<8x256xf32, #tpu.memory_space<vmem>>) attributes {dimension_semantics = [#tpu.dimension_semantics<parallel>, #tpu.dimension_semantics<arbitrary>], iteration_bounds = array<i64: 2, 1>, scalar_prefetch = 0 : i64, scratch_operands = 3 : i64, tpu.core_type = #tpu.core_type<tc>, window_params = [{transform_indices = @transform_0, window_bounds = array<i64: 8, 256>}, {transform_indices = @transform_1, window_bounds = array<i64: 8, 256>}, {transform_indices = @transform_2, window_bounds = array<i64: 1, 8, 128>}]} {
    %c1_i32 = arith.constant 1 : i32
    %0 = arith.muli %arg0, %c1_i32 : i32
    %1 = arith.addi %0, %arg1 : i32
    %c0_i32 = arith.constant 0 : i32
    %2 = arith.cmpi eq, %arg1, %c0_i32 : i32
    %3 = arith.extui %2 : i1 to i32
    %c0_i32_0 = arith.constant 0 : i32
    %4 = arith.cmpi ne, %3, %c0_i32_0 : i32
    scf.if %4 {
      %cst = arith.constant 0.000000e+00 : f32
      %14 = vector.broadcast %cst : f32 to vector<8x256xf32>
      %c0 = arith.constant 0 : index
      %c0_7 = arith.constant 0 : index
      %15 = vector.load %arg5[%c0, %c0_7] : memref<8x256xf32, #tpu.memory_space<vmem>>, vector<8x256xf32>
      tpu.vector_store %arg5[%c0, %c0_7], %14 {strides = array<i32>} : memref<8x256xf32, #tpu.memory_space<vmem>>, vector<8x256xf32>,
      %cst_8 = arith.constant 0.000000e+00 : f32
      %16 = vector.broadcast %cst_8 : f32 to vector<8x256xf32>
      %c0_9 = arith.constant 0 : index
      %c0_10 = arith.constant 0 : index
      %17 = vector.load %arg6[%c0_9, %c0_10] : memref<8x256xf32, #tpu.memory_space<vmem>>, vector<8x256xf32>
      tpu.vector_store %arg6[%c0_9, %c0_10], %16 {strides = array<i32>} : memref<8x256xf32, #tpu.memory_space<vmem>>, vector<8x256xf32>,
      %cst_11 = arith.constant 0.000000e+00 : f32
      %18 = vector.broadcast %cst_11 : f32 to vector<8x256xf32>
      %c0_12 = arith.constant 0 : index
      %c0_13 = arith.constant 0 : index
      %19 = vector.load %arg7[%c0_12, %c0_13] : memref<8x256xf32, #tpu.memory_space<vmem>>, vector<8x256xf32>
      tpu.vector_store %arg7[%c0_12, %c0_13], %18 {strides = array<i32>} : memref<8x256xf32, #tpu.memory_space<vmem>>, vector<8x256xf32>,
    } else {
    }
    %c1_i32_1 = arith.constant 1 : i32
    %5 = arith.cmpi slt, %1, %c1_i32_1 : i32
    %6 = arith.extui %5 : i1 to i32
    %c0_i32_2 = arith.constant 0 : i32
    %7 = arith.cmpi ne, %6, %c0_i32_2 : i32
    scf.if %7 {
      %cst = arith.constant 0.000000e+00 : f32
      %14 = vector.broadcast %cst : f32 to vector<8x256xf32>
      %c0_i32_7 = arith.constant 0 : i32
      %c8_i32 = arith.constant 8 : i32
      %15 = arith.muli %c0_i32_7, %c8_i32 : i32
      %c0_i32_8 = arith.constant 0 : i32
      %16 = arith.addi %15, %c0_i32_8 : i32
      %17 = tpu.assume_multiple %16, 8 : i32
      %18 = arith.index_cast %17 : i32 to index
      %c0 = arith.constant 0 : index
      %19 = vector.load %arg2[%18, %c0] : memref<8x256xf32, #tpu.memory_space<vmem>>, vector<8x256xf32>
      %20 = arith.index_cast %17 : i32 to index
      %c0_9 = arith.constant 0 : index
      %21 = vector.load %arg3[%20, %c0_9] : memref<8x256xf32, #tpu.memory_space<vmem>>, vector<8x256xf32>
      %cst_10 = arith.constant 5.000000e-01 : f32
      %22 = vector.broadcast %cst_10 : f32 to vector<8x256xf32>
      %23 = arith.mulf %22, %19 : vector<8x256xf32>
      %24 = math.tanh %23 : vector<8x256xf32>
      %25 = arith.mulf %24, %21 : vector<8x256xf32>
      %26 = arith.addf %14, %25 : vector<8x256xf32>
      %27 = arith.addf %14, %24 : vector<8x256xf32>
      %28 = arith.addf %14, %21 : vector<8x256xf32>
      %c1_i32_11 = arith.constant 1 : i32
      %c0_12 = arith.constant 0 : index
      %c0_13 = arith.constant 0 : index
      %29 = vector.load %arg5[%c0_12, %c0_13] : memref<8x256xf32, #tpu.memory_space<vmem>>, vector<8x256xf32>
      %30 = arith.addf %29, %26 : vector<8x256xf32>
      %c0_14 = arith.constant 0 : index
      %c0_15 = arith.constant 0 : index
      %31 = vector.load %arg5[%c0_14, %c0_15] : memref<8x256xf32, #tpu.memory_space<vmem>>, vector<8x256xf32>
      tpu.vector_store %arg5[%c0_14, %c0_15], %30 {strides = array<i32>} : memref<8x256xf32, #tpu.memory_space<vmem>>, vector<8x256xf32>,
      %c0_16 = arith.constant 0 : index
      %c0_17 = arith.constant 0 : index
      %32 = vector.load %arg6[%c0_16, %c0_17] : memref<8x256xf32, #tpu.memory_space<vmem>>, vector<8x256xf32>
      %33 = arith.addf %32, %27 : vector<8x256xf32>
      %c0_18 = arith.constant 0 : index
      %c0_19 = arith.constant 0 : index
      %34 = vector.load %arg6[%c0_18, %c0_19] : memref<8x256xf32, #tpu.memory_space<vmem>>, vector<8x256xf32>
      tpu.vector_store %arg6[%c0_18, %c0_19], %33 {strides = array<i32>} : memref<8x256xf32, #tpu.memory_space<vmem>>, vector<8x256xf32>,
      %c0_20 = arith.constant 0 : index
      %c0_21 = arith.constant 0 : index
      %35 = vector.load %arg7[%c0_20, %c0_21] : memref<8x256xf32, #tpu.memory_space<vmem>>, vector<8x256xf32>
      %36 = arith.addf %35, %28 : vector<8x256xf32>
      %c0_22 = arith.constant 0 : index
      %c0_23 = arith.constant 0 : index
      %37 = vector.load %arg7[%c0_22, %c0_23] : memref<8x256xf32, #tpu.memory_space<vmem>>, vector<8x256xf32>
      tpu.vector_store %arg7[%c0_22, %c0_23], %36 {strides = array<i32>} : memref<8x256xf32, #tpu.memory_space<vmem>>, vector<8x256xf32>,
    } else {
    }
    %c1_i32_3 = arith.constant 1 : i32
    %8 = arith.cmpi sge, %1, %c1_i32_3 : i32
    %9 = arith.extui %8 : i1 to i32
    %c0_i32_4 = arith.constant 0 : i32
    %10 = arith.cmpi ne, %9, %c0_i32_4 : i32
    scf.if %10 {
      %c8_i32 = arith.constant 8 : i32
      %14 = arith.muli %1, %c8_i32 : i32
      %cst = arith.constant 0.000000e+00 : f32
      %15 = vector.broadcast %cst : f32 to vector<8x256xf32>
      %c0_i32_7 = arith.constant 0 : i32
      %c8_i32_8 = arith.constant 8 : i32
      %16 = arith.muli %c0_i32_7, %c8_i32_8 : i32
      %c0_i32_9 = arith.constant 0 : i32
      %17 = arith.addi %16, %c0_i32_9 : i32
      %18 = tpu.assume_multiple %17, 8 : i32
      %19 = arith.index_cast %18 : i32 to index
      %c0 = arith.constant 0 : index
      %20 = vector.load %arg2[%19, %c0] : memref<8x256xf32, #tpu.memory_space<vmem>>, vector<8x256xf32>
      %21 = arith.index_cast %18 : i32 to index
      %c0_10 = arith.constant 0 : index
      %22 = vector.load %arg3[%21, %c0_10] : memref<8x256xf32, #tpu.memory_space<vmem>>, vector<8x256xf32>
      %cst_11 = arith.constant 5.000000e-01 : f32
      %23 = vector.broadcast %cst_11 : f32 to vector<8x256xf32>
      %24 = arith.mulf %23, %20 : vector<8x256xf32>
      %25 = math.tanh %24 : vector<8x256xf32>
      %26 = tpu.iota {dimensions = array<i32: 0>} : vector<8x256xi32>
      %27 = arith.addi %14, %18 : i32
      %28 = vector.broadcast %27 : i32 to vector<8x256xi32>
      %29 = arith.addi %26, %28 : vector<8x256xi32>
      %c8_i32_12 = arith.constant 8 : i32
      %30 = vector.broadcast %c8_i32_12 : i32 to vector<8x256xi32>
      %31 = arith.cmpi slt, %29, %30 : vector<8x256xi32>
      %cst_13 = arith.constant 0.000000e+00 : f32
      %32 = vector.broadcast %cst_13 : f32 to vector<8x256xf32>
      %33 = arith.select %31, %25, %32 : vector<8x256xi1>, vector<8x256xf32>
      %cst_14 = arith.constant 0.000000e+00 : f32
      %34 = vector.broadcast %cst_14 : f32 to vector<8x256xf32>
      %35 = arith.select %31, %22, %34 : vector<8x256xi1>, vector<8x256xf32>
      %36 = arith.mulf %33, %35 : vector<8x256xf32>
      %37 = arith.addf %15, %36 : vector<8x256xf32>
      %38 = arith.addf %15, %33 : vector<8x256xf32>
      %39 = arith.addf %15, %35 : vector<8x256xf32>
      %c1_i32_15 = arith.constant 1 : i32
      %c0_16 = arith.constant 0 : index
      %c0_17 = arith.constant 0 : index
      %40 = vector.load %arg5[%c0_16, %c0_17] : memref<8x256xf32, #tpu.memory_space<vmem>>, vector<8x256xf32>
      %41 = arith.addf %40, %37 : vector<8x256xf32>
      %c0_18 = arith.constant 0 : index
      %c0_19 = arith.constant 0 : index
      %42 = vector.load %arg5[%c0_18, %c0_19] : memref<8x256xf32, #tpu.memory_space<vmem>>, vector<8x256xf32>
      tpu.vector_store %arg5[%c0_18, %c0_19], %41 {strides = array<i32>} : memref<8x256xf32, #tpu.memory_space<vmem>>, vector<8x256xf32>,
      %c0_20 = arith.constant 0 : index
      %c0_21 = arith.constant 0 : index
      %43 = vector.load %arg6[%c0_20, %c0_21] : memref<8x256xf32, #tpu.memory_space<vmem>>, vector<8x256xf32>
      %44 = arith.addf %43, %38 : vector<8x256xf32>
      %c0_22 = arith.constant 0 : index
      %c0_23 = arith.constant 0 : index
      %45 = vector.load %arg6[%c0_22, %c0_23] : memref<8x256xf32, #tpu.memory_space<vmem>>, vector<8x256xf32>
      tpu.vector_store %arg6[%c0_22, %c0_23], %44 {strides = array<i32>} : memref<8x256xf32, #tpu.memory_space<vmem>>, vector<8x256xf32>,
      %c0_24 = arith.constant 0 : index
      %c0_25 = arith.constant 0 : index
      %46 = vector.load %arg7[%c0_24, %c0_25] : memref<8x256xf32, #tpu.memory_space<vmem>>, vector<8x256xf32>
      %47 = arith.addf %46, %39 : vector<8x256xf32>
      %c0_26 = arith.constant 0 : index
      %c0_27 = arith.constant 0 : index
      %48 = vector.load %arg7[%c0_26, %c0_27] : memref<8x256xf32, #tpu.memory_space<vmem>>, vector<8x256xf32>
      tpu.vector_store %arg7[%c0_26, %c0_27], %47 {strides = array<i32>} : memref<8x256xf32, #tpu.memory_space<vmem>>, vector<8x256xf32>,
    } else {
    }
    %c0_i32_5 = arith.constant 0 : i32
    %11 = arith.cmpi eq, %arg1, %c0_i32_5 : i32
    %12 = arith.extui %11 : i1 to i32
    %c0_i32_6 = arith.constant 0 : i32
    %13 = arith.cmpi ne, %12, %c0_i32_6 : i32
    scf.if %13 {
      %c0 = arith.constant 0 : index
      %c0_7 = arith.constant 0 : index
      %14 = vector.load %arg5[%c0, %c0_7] : memref<8x256xf32, #tpu.memory_space<vmem>>, vector<8x256xf32>
      %15 = vector.shape_cast %14 : vector<8x256xf32> to vector<1x8x256xf32>
      %cst = arith.constant dense<0.000000e+00> : vector<1xf32>
      %16 = vector.multi_reduction <add>, %15, %cst [1, 2] : vector<1x8x256xf32> to vector<1xf32>
      %17 = vector.shape_cast %16 : vector<1xf32> to vector<1x1x1xf32>
      %18 = vector.extract %17[0, 0, 0] : f32 from vector<1x1x1xf32>
      %c0_8 = arith.constant 0 : index
      %c0_9 = arith.constant 0 : index
      %19 = vector.load %arg6[%c0_8, %c0_9] : memref<8x256xf32, #tpu.memory_space<vmem>>, vector<8x256xf32>
      %20 = vector.shape_cast %19 : vector<8x256xf32> to vector<1x8x256xf32>
      %cst_10 = arith.constant dense<0.000000e+00> : vector<1xf32>
      %21 = vector.multi_reduction <add>, %20, %cst_10 [1, 2] : vector<1x8x256xf32> to vector<1xf32>
      %22 = vector.shape_cast %21 : vector<1xf32> to vector<1x1x1xf32>
      %23 = vector.extract %22[0, 0, 0] : f32 from vector<1x1x1xf32>
      %c0_11 = arith.constant 0 : index
      %c0_12 = arith.constant 0 : index
      %24 = vector.load %arg7[%c0_11, %c0_12] : memref<8x256xf32, #tpu.memory_space<vmem>>, vector<8x256xf32>
      %25 = vector.shape_cast %24 : vector<8x256xf32> to vector<1x8x256xf32>
      %cst_13 = arith.constant dense<0.000000e+00> : vector<1xf32>
      %26 = vector.multi_reduction <add>, %25, %cst_13 [1, 2] : vector<1x8x256xf32> to vector<1xf32>
      %27 = vector.shape_cast %26 : vector<1xf32> to vector<1x1x1xf32>
      %28 = vector.extract %27[0, 0, 0] : f32 from vector<1x1x1xf32>
      %29 = tpu.iota {dimensions = array<i32: 0>} : vector<8x128xi32>
      %c0_i32_14 = arith.constant 0 : i32
      %30 = vector.broadcast %c0_i32_14 : i32 to vector<8x128xi32>
      %31 = arith.cmpi eq, %29, %30 : vector<8x128xi32>
      %c1_i32_15 = arith.constant 1 : i32
      %32 = vector.broadcast %c1_i32_15 : i32 to vector<8x128xi32>
      %33 = arith.cmpi eq, %29, %32 : vector<8x128xi32>
      %c2_i32 = arith.constant 2 : i32
      %34 = vector.broadcast %c2_i32 : i32 to vector<8x128xi32>
      %35 = arith.cmpi eq, %29, %34 : vector<8x128xi32>
      %cst_16 = arith.constant 0.000000e+00 : f32
      %36 = vector.broadcast %28 : f32 to vector<8x128xf32>
      %37 = vector.broadcast %cst_16 : f32 to vector<8x128xf32>
      %38 = arith.select %35, %36, %37 : vector<8x128xi1>, vector<8x128xf32>
      %39 = vector.broadcast %23 : f32 to vector<8x128xf32>
      %40 = arith.select %33, %39, %38 : vector<8x128xi1>, vector<8x128xf32>
      %41 = vector.broadcast %18 : f32 to vector<8x128xf32>
      %42 = arith.select %31, %41, %40 : vector<8x128xi1>, vector<8x128xf32>
      %c0_17 = arith.constant 0 : index
      %c0_18 = arith.constant 0 : index
      %c0_19 = arith.constant 0 : index
      %43 = vector.load %arg4[%c0_17, %c0_18, %c0_19] : memref<1x8x128xf32, #tpu.memory_space<vmem>>, vector<1x8x128xf32>
      %44 = vector.shape_cast %43 : vector<1x8x128xf32> to vector<8x128xf32>
      %45 = vector.shape_cast %42 : vector<8x128xf32> to vector<1x8x128xf32>
      tpu.vector_store %arg4[%c0_17, %c0_18, %c0_19], %45 {strides = array<i32>} : memref<1x8x128xf32, #tpu.memory_space<vmem>>, vector<1x8x128xf32>,
    } else {
    }
    return
  }
  func.func @transform_0(%arg0: i32, %arg1: i32) -> (i32, i32) {
    %c1_i32 = arith.constant 1 : i32
    %0 = arith.muli %arg0, %c1_i32 : i32
    %1 = arith.addi %0, %arg1 : i32
    %c0_i32 = arith.constant 0 : i32
    %2 = arith.minsi %1, %c0_i32 : i32
    %c0_i32_0 = arith.constant 0 : i32
    %c0_i32_1 = arith.constant 0 : i32
    return %2, %c0_i32_0 : i32, i32
  }
  func.func @transform_1(%arg0: i32, %arg1: i32) -> (i32, i32) {
    %c1_i32 = arith.constant 1 : i32
    %0 = arith.muli %arg0, %c1_i32 : i32
    %1 = arith.addi %0, %arg1 : i32
    %c0_i32 = arith.constant 0 : i32
    %2 = arith.minsi %1, %c0_i32 : i32
    %c0_i32_0 = arith.constant 0 : i32
    %c0_i32_1 = arith.constant 0 : i32
    return %2, %c0_i32_0 : i32, i32
  }
  func.func @transform_2(%arg0: i32, %arg1: i32) -> (i32, i32, i32) {
    %c0_i32 = arith.constant 0 : i32
    %c0_i32_0 = arith.constant 0 : i32
    %c0_i32_1 = arith.constant 0 : i32
    return %arg0, %c0_i32, %c0_i32_0 : i32, i32, i32
  }
}

</mosaic_0001>

<llo_original>
// kernel: tpu_custom_call.1
$region0: #{tpu_custom_call.1}
  #allocation0 [shape = 'u32[]', space=smem, size = 0x4, offset = 0x4, fixed_abs, tag = 'smem constant byte address 0x4 - core index']
  #allocation1 [shape = 'u32[144,128]{1,0:T(1,128)}', space=vmem, size = 0x12000, scoped, tag = 'internal scratch']
  #allocation2 [shape = 'f32[8,256]{1,0:T(8,128)}', space=vmem, size = 0x2000, scoped, tag = 'scratch operand']
  #allocation3 [shape = 'f32[8,256]{1,0:T(8,128)}', space=vmem, size = 0x2000, scoped, tag = 'scratch operand']
  #allocation4 [shape = 'f32[8,256]{1,0:T(8,128)}', space=vmem, size = 0x2000, scoped, tag = 'scratch operand']
  %s0 = inlined_call_operand.hbm [shape: f32[8,256], index: 0, kind: input, shape index: {}]
  %s1 = inlined_call_operand.hbm [shape: f32[8,256], index: 1, kind: input, shape index: {}]
  %s2 = inlined_call_operand.hbm [shape: f32[2,8,128], index: 2, kind: output, shape index: {}]
  %s3 = sld [smem:[#allocation0]]
  $region65: #{tpu_custom_call.1} parent=0
    _
  %s5 = ssub.s32 1, %s3
  %s6 = scalar_select 0, %s5, %s3
  $region1: #{tpu_custom_call.1} parent=0
    #allocation5 [shape = 'u8[16384]{0}', space=vmem, size = 0x4000, scoped, tag = 'input window, operand 0']
    #allocation6 [shape = 's32[2]{0}', space=sflag, size = 0x8, scoped, tag = 'scoped memory for tpu_custom_call.1']
    #allocation7 [shape = 's32[2]{0}', space=sflag, size = 0x8, scoped, tag = 'scoped memory for tpu_custom_call.1']
    #allocation8 [shape = 'u8[16384]{0}', space=vmem, size = 0x4000, scoped, tag = 'input window, operand 1']
    #allocation9 [shape = 's32[2]{0}', space=sflag, size = 0x8, scoped, tag = 'scoped memory for tpu_custom_call.1']
    #allocation10 [shape = 'u8[8192]{0}', space=vmem, size = 0x2000, scoped, tag = 'output window, operand 0']
    %7 = vsyncpa [#allocation6], 0
    %s8 = scalar_lea.sflag [#allocation6], 1
    %9 = vsyncpa %s8, 0
    %10 = vsyncpa [#allocation9], 0
    %s11 = scalar_lea.sflag [#allocation9], 1
    %12 = vsyncpa %s11, 0
    %13 = vsyncpa [#allocation7], 0
    %s14 = scalar_lea.sflag [#allocation7], 1
    %15 = vsyncpa %s14, 0
    loop: start=0, step=1, limit=4
    $region2: #{tpu_custom_call.1} parent=1 // loop_pre_header
      _
    $region3: #{tpu_custom_call.1} parent=1 // loop_header
      %s17 = sphi 0, %s21
      %p18 = scmp.ge.s32.totalorder %s17, 4
      %s24 = sphi 0, %s36
      %s25 = sphi 0, %s32
      %s26 = sphi 0, %s24
      %s27 = sphi 0, %s25
      %s28 = sphi 0, %s26
      %s29 = sphi 0, %s27
      %s45 = sphi 0, %s47
      %s48 = sphi 0, %s45
      %s49 = sphi 0, %s48
      %s65 = sphi 0, %s49
      %s77 = sphi 0, %s79
      %s80 = sphi 0, %s77
      %s81 = sphi 0, %s80
      %s97 = sphi 0, %s81
      %s103 = sphi 0, %s105
      %s106 = sphi 0, %s103
      %s107 = sphi 0, %s106
      %s123 = sphi 0, %s107
    $region4: #{tpu_custom_call.1} parent=1 // loop_header_branch
      %20 = sbr.rel (%p18) target = $region8
    $region5: #{tpu_custom_call.1} parent=1 // loop_body
      %s22 = ssub.s32 %s17, 1
      %s23 = ssub.s32 %s17, 2
      %s30 = sadd.s32 1, %s25
      %p31 = scmp.ge.s32.totalorder %s30, 1
      %s32 = scalar_select %p31, 0, %s30
      %s33 = sadd.s32 1, %s24
      %s34 = scalar_select %p31, %s33, %s24
      %p35 = scmp.ge.s32.totalorder %s34, 2
      %s36 = scalar_select %p35, 0, %s34
      %s37 = sadd.s32 %s24, %s25
      %p38 = scmp.lt.s32.totalorder %s37, 0
      %s39 = scalar_select %p38, %s37, 0
      %s40 = sadd.s32 %s36, %s32
      %p41 = scmp.lt.s32.totalorder %s40, 0
      %s42 = scalar_select %p41, %s40, 0
      %s43 = ssub.s32 %s39, %s42
      %p44 = scmp.eq.s32.totalorder %s43, 0
      %s46 = sadd.s32 %s45, 1
      %s47 = scalar_select %p44, %s45, %s46
      %p50 = pneg %p44
      %p51 = scmp.eq.s32.totalorder %s17, 1
      %p52 = por %p50, %p51
      %p53 = scmp.ne.s32.totalorder %s45, %s48
      %p54 = scmp.eq.s32.totalorder %s17, 0
      %p55 = por %p53, %p54
      %p56 = scmp.ne.s32.totalorder %s45, %s48
      %p57 = scmp.eq.s32.totalorder %s22, 1
      %p58 = por %p56, %p57
      %p59 = scmp.ne.s32.totalorder %s48, %s49
      %p60 = scmp.eq.s32.totalorder %s22, 0
      %p61 = por %p59, %p60
      %p62 = scmp.ne.s32.totalorder %s48, %s49
      %p63 = scmp.eq.s32.totalorder %s23, 1
      %p64 = por %p62, %p63
      %p66 = scmp.ne.s32.totalorder %s49, %s65
      %p67 = scmp.eq.s32.totalorder %s23, 0
      %p68 = por %p66, %p67
      %s69 = sadd.s32 %s24, %s25
      %p70 = scmp.lt.s32.totalorder %s69, 0
      %s71 = scalar_select %p70, %s69, 0
      %s72 = sadd.s32 %s36, %s32
      %p73 = scmp.lt.s32.totalorder %s72, 0
      %s74 = scalar_select %p73, %s72, 0
      %s75 = ssub.s32 %s71, %s74
      %p76 = scmp.eq.s32.totalorder %s75, 0
      %s78 = sadd.s32 %s77, 1
      %s79 = scalar_select %p76, %s77, %s78
      %p82 = pneg %p76
      %p83 = scmp.eq.s32.totalorder %s17, 1
      %p84 = por %p82, %p83
      %p85 = scmp.ne.s32.totalorder %s77, %s80
      %p86 = scmp.eq.s32.totalorder %s17, 0
      %p87 = por %p85, %p86
      %p88 = scmp.ne.s32.totalorder %s77, %s80
      %p89 = scmp.eq.s32.totalorder %s22, 1
      %p90 = por %p88, %p89
      %p91 = scmp.ne.s32.totalorder %s80, %s81
      %p92 = scmp.eq.s32.totalorder %s22, 0
      %p93 = por %p91, %p92
      %p94 = scmp.ne.s32.totalorder %s80, %s81
      %p95 = scmp.eq.s32.totalorder %s23, 1
      %p96 = por %p94, %p95
      %p98 = scmp.ne.s32.totalorder %s81, %s97
      %p99 = scmp.eq.s32.totalorder %s23, 0
      %p100 = por %p98, %p99
      %s101 = ssub.s32 %s24, %s36
      %p102 = scmp.eq.s32.totalorder %s101, 0
      %s104 = sadd.s32 %s103, 1
      %s105 = scalar_select %p102, %s103, %s104
      %p108 = pneg %p102
      %p109 = scmp.eq.s32.totalorder %s17, 1
      %p110 = por %p108, %p109
      %p111 = scmp.ne.s32.totalorder %s103, %s106
      %p112 = scmp.eq.s32.totalorder %s17, 0
      %p113 = por %p111, %p112
      %p114 = scmp.ne.s32.totalorder %s103, %s106
      %p115 = scmp.eq.s32.totalorder %s22, 1
      %p116 = por %p114, %p115
      %p117 = scmp.ne.s32.totalorder %s106, %s107
      %p118 = scmp.eq.s32.totalorder %s22, 0
      %p119 = por %p117, %p118
      %p120 = scmp.ne.s32.totalorder %s106, %s107
      %p121 = scmp.eq.s32.totalorder %s23, 1
      %p122 = por %p120, %p121
      %p124 = scmp.ne.s32.totalorder %s107, %s123
      %p125 = scmp.eq.s32.totalorder %s23, 0
      %p126 = por %p124, %p125
      %p127 = scmp.le.s32.totalorder 1, %s17
      %p128 = scmp.lt.s32.totalorder %s17, 3
      %p129 = pnand %p127, %p128
      %p130 = pneg %p129
      // Predicated region
      $region9: #{tpu_custom_call.1} parent=5 // pred_check
        _
      $region10: #{tpu_custom_call.1} parent=5 // pred_check_branch
        %132 = sbr.rel (%p129) target = $region12
      $region11: #{tpu_custom_call.1} parent=5 // pred_region
        %s133 = ssub.s32 %s17, 1
      $region12: #{tpu_custom_call.1} parent=5 // pred_fallthru
        _
      %p134 = scmp.lt.s32.totalorder %s17, 2
      // Predicated region
      $region13: #{tpu_custom_call.1} parent=5 // pred_check
        %p135 = pneg %p134
      $region14: #{tpu_custom_call.1} parent=5 // pred_check_branch
        %137 = sbr.rel (%p135) target = $region16
      $region15: #{tpu_custom_call.1} parent=5 // pred_region
        // Predicated region
        $region17: #{tpu_custom_call.1} parent=15 // pred_check
          %p138 = pneg %p55
        $region18: #{tpu_custom_call.1} parent=15 // pred_check_branch
          %140 = sbr.rel (%p138) target = $region20
        $region19: #{tpu_custom_call.1} parent=15 // pred_region
          %s141 = sand.u32 %s45, 1
          %s142 = scalar_lea.sflag [#allocation6], %s141
          %s143 = sand.u32 %s45, 1
          %s144 = smul.addr %s143, 16
          %s145 = scalar_lea.vmem [#allocation5], %s144
          %s146 = sadd.s32 %s24, %s25
          %p147 = scmp.lt.s32.totalorder %s146, 0
          %s148 = scalar_select %p147, %s146, 0
          %s150 = ssub.s32 256, 256
          %151 = vsyncadd %s142, %s150
          %s152 = smul.addr %s148, 2
          %s153 = smul.addr %s152, 128
          %s154 = scalar_lea.hbm %s0, %s153
          %s156 = sshll.u32 %s145, 4
          %s157 = int_to_ptr.vmem [resolvable:$true] %s156
          %159 = dma.hbm_to_vmem [thread:$0]  %s154, 256, %s157, %s142
        $region20: #{tpu_custom_call.1} parent=15 // pred_fallthru
          _
        // Predicated region
        $region21: #{tpu_custom_call.1} parent=15 // pred_check
          %p160 = pneg %p87
        $region22: #{tpu_custom_call.1} parent=15 // pred_check_branch
          %162 = sbr.rel (%p160) target = $region24
        $region23: #{tpu_custom_call.1} parent=15 // pred_region
          %s163 = sand.u32 %s77, 1
          %s164 = scalar_lea.sflag [#allocation9], %s163
          %s165 = sand.u32 %s77, 1
          %s166 = smul.addr %s165, 16
          %s167 = scalar_lea.vmem [#allocation8], %s166
          %s168 = sadd.s32 %s24, %s25
          %p169 = scmp.lt.s32.totalorder %s168, 0
          %s170 = scalar_select %p169, %s168, 0
          %s172 = ssub.s32 256, 256
          %173 = vsyncadd %s164, %s172
          %s174 = smul.addr %s170, 2
          %s175 = smul.addr %s174, 128
          %s176 = scalar_lea.hbm %s1, %s175
          %s178 = sshll.u32 %s167, 4
          %s179 = int_to_ptr.vmem [resolvable:$true] %s178
          %181 = dma.hbm_to_vmem [thread:$0]  %s176, 256, %s179, %s164
        $region24: #{tpu_custom_call.1} parent=15 // pred_fallthru
          _
      $region16: #{tpu_custom_call.1} parent=5 // pred_fallthru
        _
      %p182 = scmp.le.s32.totalorder 1, %s17
      %p183 = scmp.lt.s32.totalorder %s17, 3
      %p184 = pnand %p182, %p183
      %p185 = pneg %p184
      // Predicated region
      $region25: #{tpu_custom_call.1} parent=5 // pred_check
        _
      $region26: #{tpu_custom_call.1} parent=5 // pred_check_branch
        %187 = sbr.rel (%p184) target = $region28
      $region27: #{tpu_custom_call.1} parent=5 // pred_region
        %s188 = ssub.s32 %s17, 1
        %s189 = sand.u32 %s48, 1
        %s190 = scalar_lea.sflag [#allocation6], %s189
        %s191 = sand.u32 %s48, 1
        %s192 = smul.addr %s191, 16
        %s193 = scalar_lea.vmem [#allocation5], %s192
        // Predicated region
        $region29: #{tpu_custom_call.1} parent=27 // pred_check
          %p194 = pneg %p61
        $region30: #{tpu_custom_call.1} parent=27 // pred_check_branch
          %196 = sbr.rel (%p194) target = $region32
        $region31: #{tpu_custom_call.1} parent=27 // pred_region
          %197 = dma.done %s190, 256
        $region32: #{tpu_custom_call.1} parent=27 // pred_fallthru
          _
        %s198 = sand.u32 %s80, 1
        %s199 = scalar_lea.sflag [#allocation9], %s198
        %s200 = sand.u32 %s80, 1
        %s201 = smul.addr %s200, 16
        %s202 = scalar_lea.vmem [#allocation8], %s201
        // Predicated region
        $region33: #{tpu_custom_call.1} parent=27 // pred_check
          %p203 = pneg %p93
        $region34: #{tpu_custom_call.1} parent=27 // pred_check_branch
          %205 = sbr.rel (%p203) target = $region36
        $region35: #{tpu_custom_call.1} parent=27 // pred_region
          %206 = dma.done %s199, 256
        $region36: #{tpu_custom_call.1} parent=27 // pred_fallthru
          _
        %s207 = sand.u32 %s48, 1
        %s208 = scalar_lea.sflag [#allocation6], %s207
        %s209 = sand.u32 %s48, 1
        %s210 = smul.addr %s209, 16
        %s211 = scalar_lea.vmem [#allocation5], %s210
        %p212 = pneg %p61
        %p213 = pneg %p58
        %s214 = sand.u32 %s80, 1
        %s215 = scalar_lea.sflag [#allocation9], %s214
        %s216 = sand.u32 %s80, 1
        %s217 = smul.addr %s216, 16
        %s218 = scalar_lea.vmem [#allocation8], %s217
        %p219 = pneg %p93
        %p220 = pneg %p90
        %p221 = pneg %p119
        %p222 = pneg %p116
        %s223 = sand.u32 %s106, 1
        %s224 = scalar_lea.sflag [#allocation7], %s223
        %s225 = sand.u32 %s106, 1
        %s226 = smul.addr %s225, 8
        %s227 = scalar_lea.vmem [#allocation10], %s226
        %s228 = sadd.s32 %s26, %s27
        %p229 = scmp.lt.s32.totalorder %s228, 0
        %s230 = scalar_select %p229, %s228, 0
        %s231 = sadd.s32 %s26, %s27
        %p232 = scmp.lt.s32.totalorder %s231, 0
        %s233 = scalar_select %p232, %s231, 0
        %s234 = sadd.s32 %s26, %s27
        %p235 = scmp.eq.s32.totalorder %s27, 0
        // Predicated region
        $region37: #{tpu_custom_call.1} parent=27 // pred_check
          %p236 = pneg %p235
        $region38: #{tpu_custom_call.1} parent=27 // pred_check_branch
          %238 = sbr.rel (%p236) target = $region40
        $region39: #{tpu_custom_call.1} parent=27 // pred_region
          %239 = vst [vmem:[#allocation2] sm:$0xff] 0.0
          %240 = vst [vmem:[#allocation2 + $0x8] sm:$0xff] 0.0
          %241 = vst [vmem:[#allocation3] sm:$0xff] 0.0
          %242 = vst [vmem:[#allocation3 + $0x8] sm:$0xff] 0.0
          %243 = vst [vmem:[#allocation4] sm:$0xff] 0.0
          %244 = vst [vmem:[#allocation4 + $0x8] sm:$0xff] 0.0
        $region40: #{tpu_custom_call.1} parent=27 // pred_fallthru
          _
        %p245 = scmp.lt.s32.totalorder %s234, 1
        // Predicated region
        $region41: #{tpu_custom_call.1} parent=27 // pred_check
          %p246 = pneg %p245
        $region42: #{tpu_custom_call.1} parent=27 // pred_check_branch
          %248 = sbr.rel (%p246) target = $region44
        $region43: #{tpu_custom_call.1} parent=27 // pred_region
          %s249 = smul.u32 0, 2
          %s250 = smul.addr %s249, 8
          %s251 = scalar_lea.vmem %s193, %s250 [#allocation5]
          %v252 = vld [vmem:[%s251] sm:$0xff]
          %v253 = vld [vmem:[%s251 + $0x8] sm:$0xff]
          %s254 = smul.addr %s249, 8
          %s255 = scalar_lea.vmem %s202, %s254 [#allocation8]
          %v256 = vld [vmem:[%s255] sm:$0xff]
          %v257 = vld [vmem:[%s255 + $0x8] sm:$0xff]
          %v258 = vmul.f32 %v252, 0.5
          %v259 = vmul.f32 %v253, 0.5
          %v260 = vtanh.pop %v258
          %v261 = vtanh.pop %v259
          %v262 = vmul.f32 %v260, %v256
          %v263 = vmul.f32 %v261, %v257
          %v264 = vadd.f32 %v262, 0.0
          %v265 = vadd.f32 %v263, 0.0
          %v266 = vadd.f32 %v260, 0.0
          %v267 = vadd.f32 %v261, 0.0
          %v268 = vadd.f32 %v256, 0.0
          %v269 = vadd.f32 %v257, 0.0
          %v270 = vld [vmem:[#allocation2] sm:$0xff]
          %v271 = vld [vmem:[#allocation2 + $0x8] sm:$0xff]
          %v272 = vadd.f32 %v270, %v264
          %v273 = vadd.f32 %v271, %v265
          %274 = vst [vmem:[#allocation2] sm:$0xff] %v272
          %275 = vst [vmem:[#allocation2 + $0x8] sm:$0xff] %v273
          %v276 = vld [vmem:[#allocation3] sm:$0xff]
          %v277 = vld [vmem:[#allocation3 + $0x8] sm:$0xff]
          %v278 = vadd.f32 %v276, %v266
          %v279 = vadd.f32 %v277, %v267
          %280 = vst [vmem:[#allocation3] sm:$0xff] %v278
          %281 = vst [vmem:[#allocation3 + $0x8] sm:$0xff] %v279
          %v282 = vld [vmem:[#allocation4] sm:$0xff]
          %v283 = vld [vmem:[#allocation4 + $0x8] sm:$0xff]
          %v284 = vadd.f32 %v282, %v268
          %v285 = vadd.f32 %v283, %v269
          %286 = vst [vmem:[#allocation4] sm:$0xff] %v284
          %287 = vst [vmem:[#allocation4 + $0x8] sm:$0xff] %v285
        $region44: #{tpu_custom_call.1} parent=27 // pred_fallthru
          _
        %p288 = scmp.ge.s32.totalorder %s234, 1
        // Predicated region
        $region45: #{tpu_custom_call.1} parent=27 // pred_check
          %p289 = pneg %p288
        $region46: #{tpu_custom_call.1} parent=27 // pred_check_branch
          %291 = sbr.rel (%p289) target = $region48
        $region47: #{tpu_custom_call.1} parent=27 // pred_region
          %s292 = smul.u32 %s234, 8
          %s293 = smul.u32 0, 2
          %s294 = smul.addr %s293, 8
          %s295 = scalar_lea.vmem %s193, %s294 [#allocation5]
          %v296 = vld [vmem:[%s295] sm:$0xff]
          %v297 = vld [vmem:[%s295 + $0x8] sm:$0xff]
          %s298 = smul.addr %s293, 8
          %s299 = scalar_lea.vmem %s202, %s298 [#allocation8]
          %v300 = vld [vmem:[%s299] sm:$0xff]
          %v301 = vld [vmem:[%s299 + $0x8] sm:$0xff]
          %v302 = vmul.f32 %v296, 0.5
          %v303 = vmul.f32 %v297, 0.5
          %v304 = vtanh.pop %v302
          %v305 = vtanh.pop %v303
          %v306 = vlaneseq
          %v307 = vshrl.u32 %v306, 7
          %s308 = sadd.s32 %s292, 0
          %v309 = vstv %s308
          %v310 = vadd.s32 %v307, %v309
          %vm311 = vcmp.lt.s32.totalorder %v310, 8
          %v312 = vsel %vm311, %v304, 0.0
          %v313 = vsel %vm311, %v305, 0.0
          %v314 = vsel %vm311, %v300, 0.0
          %v315 = vsel %vm311, %v301, 0.0
          %v316 = vmul.f32 %v312, %v314
          %v317 = vmul.f32 %v313, %v315
          %v318 = vadd.f32 %v316, 0.0
          %v319 = vadd.f32 %v317, 0.0
          %v320 = vadd.f32 %v312, 0.0
          %v321 = vadd.f32 %v313, 0.0
          %v322 = vadd.f32 %v314, 0.0
          %v323 = vadd.f32 %v315, 0.0
          %v324 = vld [vmem:[#allocation2] sm:$0xff]
          %v325 = vld [vmem:[#allocation2 + $0x8] sm:$0xff]
          %v326 = vadd.f32 %v324, %v318
          %v327 = vadd.f32 %v325, %v319
          %328 = vst [vmem:[#allocation2] sm:$0xff] %v326
          %329 = vst [vmem:[#allocation2 + $0x8] sm:$0xff] %v327
          %v330 = vld [vmem:[#allocation3] sm:$0xff]
          %v331 = vld [vmem:[#allocation3 + $0x8] sm:$0xff]
          %v332 = vadd.f32 %v330, %v320
          %v333 = vadd.f32 %v331, %v321
          %334 = vst [vmem:[#allocation3] sm:$0xff] %v332
          %335 = vst [vmem:[#allocation3 + $0x8] sm:$0xff] %v333
          %v336 = vld [vmem:[#allocation4] sm:$0xff]
          %v337 = vld [vmem:[#allocation4 + $0x8] sm:$0xff]
          %v338 = vadd.f32 %v336, %v322
          %v339 = vadd.f32 %v337, %v323
          %340 = vst [vmem:[#allocation4] sm:$0xff] %v338
          %341 = vst [vmem:[#allocation4 + $0x8] sm:$0xff] %v339
        $region48: #{tpu_custom_call.1} parent=27 // pred_fallthru
          _
        // Predicated region
        $region49: #{tpu_custom_call.1} parent=27 // pred_check
          %p342 = pneg %p235
        $region50: #{tpu_custom_call.1} parent=27 // pred_check_branch
          %344 = sbr.rel (%p342) target = $region52
        $region51: #{tpu_custom_call.1} parent=27 // pred_region
          %v345 = vld [vmem:[#allocation2] sm:$0xff]
          %v346 = vld [vmem:[#allocation2 + $0x8] sm:$0xff]
          %v347 = vadd.f32 %v345, %v346
          %348 = vadd.xlane.f32.xlu0 %v347
          %v349 = vpop.xlane.xlu0 %348
          %v350 = vrot.slane %v349, 4
          %v351 = vadd.f32 %v349, %v350
          %v352 = vrot.slane %v351, 2
          %v353 = vadd.f32 %v351, %v352
          %v354 = vrot.slane %v353, 1
          %v355 = vadd.f32 %v353, %v354
          %s356 = vtos %v355
          %v357 = vld [vmem:[#allocation3] sm:$0xff]
          %v358 = vld [vmem:[#allocation3 + $0x8] sm:$0xff]
          %v359 = vadd.f32 %v357, %v358
          %360 = vadd.xlane.f32.xlu0 %v359
          %v361 = vpop.xlane.xlu0 %360
          %v362 = vrot.slane %v361, 4
          %v363 = vadd.f32 %v361, %v362
          %v364 = vrot.slane %v363, 2
          %v365 = vadd.f32 %v363, %v364
          %v366 = vrot.slane %v365, 1
          %v367 = vadd.f32 %v365, %v366
          %s368 = vtos %v367
          %v369 = vld [vmem:[#allocation4] sm:$0xff]
          %v370 = vld [vmem:[#allocation4 + $0x8] sm:$0xff]
          %v371 = vadd.f32 %v369, %v370
          %372 = vadd.xlane.f32.xlu0 %v371
          %v373 = vpop.xlane.xlu0 %372
          %v374 = vrot.slane %v373, 4
          %v375 = vadd.f32 %v373, %v374
          %v376 = vrot.slane %v375, 2
          %v377 = vadd.f32 %v375, %v376
          %v378 = vrot.slane %v377, 1
          %v379 = vadd.f32 %v377, %v378
          %s380 = vtos %v379
          %v381 = vlaneseq
          %v382 = vshrl.u32 %v381, 7
          %vm383 = vcmp.eq.s32.totalorder %v382, 0
          %vm384 = vcmp.eq.s32.totalorder %v382, 1
          %vm385 = vcmp.eq.s32.totalorder %v382, 2
          %v386 = vstv %s380
          %v387 = vsel %vm385, %v386, 0.0
          %v388 = vstv %s368
          %v389 = vsel %vm384, %v388, %v387
          %v390 = vstv %s356
          %v391 = vsel %vm383, %v390, %v389
          %392 = vst [vmem:[%s227] sm:$0xff] %v391
        $region52: #{tpu_custom_call.1} parent=27 // pred_fallthru
          _
        %s393 = sand.u32 %s106, 1
        %s394 = scalar_lea.sflag [#allocation7], %s393
        %s395 = sand.u32 %s106, 1
        %s396 = smul.addr %s395, 8
        %s397 = scalar_lea.vmem [#allocation10], %s396
        // Predicated region
        $region53: #{tpu_custom_call.1} parent=27 // pred_check
          %p398 = pneg %p116
        $region54: #{tpu_custom_call.1} parent=27 // pred_check_branch
          %400 = sbr.rel (%p398) target = $region56
        $region55: #{tpu_custom_call.1} parent=27 // pred_region
          %s402 = ssub.s32 128, 128
          %403 = vsyncadd %s394, %s402
          %s404 = smul.addr %s26, 128
          %s405 = scalar_lea.hbm %s2, %s404
          %s407 = sshll.u32 %s397, 4
          %s408 = int_to_ptr.vmem [resolvable:$true] %s407
          %410 = dma.vmem_to_hbm [thread:$0]  %s408, 128, %s405, %s394
        $region56: #{tpu_custom_call.1} parent=27 // pred_fallthru
          _
      $region28: #{tpu_custom_call.1} parent=5 // pred_fallthru
        _
      %p411 = scmp.le.s32.totalorder 2, %s17
      // Predicated region
      $region57: #{tpu_custom_call.1} parent=5 // pred_check
        %p412 = pneg %p411
      $region58: #{tpu_custom_call.1} parent=5 // pred_check_branch
        %414 = sbr.rel (%p412) target = $region60
      $region59: #{tpu_custom_call.1} parent=5 // pred_region
        %s415 = ssub.s32 %s17, 2
        // Predicated region
        $region61: #{tpu_custom_call.1} parent=59 // pred_check
          %p416 = pneg %p122
        $region62: #{tpu_custom_call.1} parent=59 // pred_check_branch
          %418 = sbr.rel (%p416) target = $region64
        $region63: #{tpu_custom_call.1} parent=59 // pred_region
          %s419 = sand.u32 %s107, 1
          %s420 = scalar_lea.sflag [#allocation7], %s419
          %s421 = sand.u32 %s107, 1
          %s422 = smul.addr %s421, 8
          %s423 = scalar_lea.vmem [#allocation10], %s422
          %424 = dma.done %s420, 128
        $region64: #{tpu_custom_call.1} parent=59 // pred_fallthru
          _
      $region60: #{tpu_custom_call.1} parent=5 // pred_fallthru
        _
    $region6: #{tpu_custom_call.1} parent=1 // loop_footer
      %s21 = sadd.s32 1, %s17
    $region7: #{tpu_custom_call.1} parent=1 // loop_footer_branch
      %16 = sbr.rel target = $region3
    $region8: #{tpu_custom_call.1} parent=1 // loop_exit
      _
    %425 = vsyncpa [#allocation6], 1
    %s426 = scalar_lea.sflag [#allocation6], 1
    %427 = vsyncpa %s426, 1
    %428 = vsyncpa [#allocation9], 1
    %s429 = scalar_lea.sflag [#allocation9], 1
    %430 = vsyncpa %s429, 1
    %431 = vsyncpa [#allocation7], 1
    %s432 = scalar_lea.sflag [#allocation7], 1
    %433 = vsyncpa %s432, 1

</llo_original>
